<compile_context>
chip_gen: v5e
topology: v5e:2x2
jax: 0.10.0
libtpu: 0.0.40
codegen_flags: <defaults>
</compile_context>

<pallas_src>
import functools

import jax
import jax.numpy as jnp
from jax.experimental import pallas as pl
from jax.experimental.pallas import tpu as pltpu


def _round_up(v, m):
    return ((v + m - 1) // m) * m


def _gnn_actor_kernel(adj_ref, x_ref, w_ref, c_ref, mu_ref, *, fin_w, lw):
    """Single invocation; activations live in the (N, B*H) lane layout.

    adj_ref : (N, N)              shared normalized adjacency Â
    x_ref   : (N, fin_w)          node features, lane b*Fin + f (zero-padded)
    w_ref   : (fin_w + 2*lw, lw)  [kron(I_B,W1); kron(I_B,W2); kron(I_B,Wmu)/N]
    c_ref   : (3, lw)  f32        [b1_lane; b2_lane; af*w_af + b_mu (lane b*A+a)]
    mu_ref  : (1, lw)  f32        mu in lane layout (lane b*A + a)
    """
    f32 = jnp.float32
    adj = adj_ref[...]                                    # (N, N)
    x = x_ref[...]                                        # (N, fin_w)

    # GCN layer 1, adjacency-first (Fin << H): relu( (Â·X)·kron(I_B,W1) + b1 )
    t = jnp.dot(adj, x, preferred_element_type=f32)       # (N, fin_w)
    h = jnp.dot(t.astype(w_ref.dtype), w_ref[0:fin_w, :],
                preferred_element_type=f32)               # (N, lw)
    h = jnp.maximum(h + c_ref[0:1, :], 0.0)

    # GCN layer 2: relu( Â·(H·kron(I_B,W2)) + b2 )
    s = jnp.dot(h.astype(w_ref.dtype), w_ref[fin_w:fin_w + lw, :],
                preferred_element_type=f32)               # (N, lw)
    h = jnp.dot(adj, s.astype(adj.dtype), preferred_element_type=f32)
    h = jnp.maximum(h + c_ref[1:2, :], 0.0)

    # global_mean_pool over nodes: sublane sum (1/N is folded into kron(Wmu)).
    pooled = jnp.sum(h, axis=0, keepdims=True)            # (1, lw)

    # fc_mu head in lane layout: pooled·kron(I_B,Wmu)/N + (af·w_af + b_mu).
    mu = (jnp.dot(pooled.astype(w_ref.dtype),
                  w_ref[fin_w + lw:fin_w + 2 * lw, :],
                  preferred_element_type=f32)
          + c_ref[2:3, :])                                # (1, lw)
    mu_ref[...] = mu


@functools.partial(jax.jit, static_argnames=("compute_dtype",))
def gnn_actor_forward(adj_norm, x, add_feat, params, compute_dtype=jnp.float32):
    """Runs the Pallas kernel. Returns (mu, sigma), each (B, A)."""
    B, N, Fin = x.shape
    H = params["w1"].shape[1]
    A = params["bmu"].shape[1]
    f32 = jnp.float32

    fin_w = _round_up(B * Fin, 128)       # lane width of input-feature slab
    lw = _round_up(B * H, 128)            # lane width of hidden / output slabs

    def pad_to(a, rows, cols):
        return jnp.pad(a, ((0, rows - a.shape[0]), (0, cols - a.shape[1])))

    eye_b = jnp.eye(B, dtype=f32)
    # Per-graph weights as block-diagonal krons (tiny: O((B*H)^2), not (B*N)^2).
    w1k = pad_to(jnp.kron(eye_b, params["w1"]), fin_w, lw)              # (fin_w, lw)
    w2k = pad_to(jnp.kron(eye_b, params["w2"]), lw, lw)                 # (lw, lw)
    wmuk = pad_to(jnp.kron(eye_b, params["wmu"][:H, :] / N), lw, lw)    # 1/N pooling folded in
    wslab = jnp.concatenate([w1k, w2k, wmuk], axis=0).astype(compute_dtype)

    # f32 constants slab: biases in lane layout + additional-feature head term.
    b1_lane = pad_to(jnp.tile(params["b1"], (1, B)), 1, lw)
    b2_lane = pad_to(jnp.tile(params["b2"], (1, B)), 1, lw)
    af_row = pad_to((add_feat.astype(f32) * params["wmu"][H:, :]
                     + params["bmu"]).reshape(1, B * A), 1, lw)
    cslab = jnp.concatenate([b1_lane, b2_lane, af_row], axis=0)         # (3, lw)

    # Node features in lane layout: lane index = b*Fin + f, zero-padded.
    x_lane = pad_to(jnp.transpose(x, (1, 0, 2)).reshape(N, B * Fin).astype(f32),
                    N, fin_w).astype(compute_dtype)
    adj = adj_norm.astype(compute_dtype)

    kernel = functools.partial(_gnn_actor_kernel, fin_w=fin_w, lw=lw)
    # Single invocation (no grid): one TensorCore does all the work — at these
    # sizes that beats any grid split on v5e/v6e; scale-up on v7x should use
    # CORE_PARALLEL / pl.core_map rather than a plain "parallel" grid axis.
    mu_slab = pl.pallas_call(
        kernel,
        out_shape=jax.ShapeDtypeStruct((1, lw), f32),
        in_specs=[pl.BlockSpec(memory_space=pltpu.MemorySpace.VMEM)] * 4,
        out_specs=pl.BlockSpec(memory_space=pltpu.MemorySpace.VMEM),
    )(adj, x_lane, wslab, cslab)

    mu = mu_slab[0, :B * A].reshape(B, A)
    # sigma is batch-independent: compute once outside the kernel and broadcast.
    sigma = jnp.broadcast_to(jnp.exp(params["log_sigma"]), (B, A))
    return mu, sigma


def normalized_adjacency(edge_index, num_nodes):
    """Dense GCN propagation matrix D^{-1/2}(A+I)D^{-1/2} (A[dst,src]=1)."""
    # TODO(synk): the scatter building the dense adjacency from edge_index is
    # plain-JAX wrapper work (no clean Pallas TPU scatter equivalent).
    src, dst = edge_index[0], edge_index[1]
    A = jnp.zeros((num_nodes, num_nodes), jnp.float32)
    A = A.at[dst, src].set(1.0)           # message flows src -> dst
    A = A + jnp.eye(num_nodes, dtype=jnp.float32)
    deg = jnp.sum(A, axis=1)
    dinv = jnp.where(deg > 0, 1.0 / jnp.sqrt(deg), 0.0)
    return A * dinv[:, None] * dinv[None, :]


def _reference(adj_norm, x, add_feat, params):
    """Pure-JAX reference of the same forward pass (for a sanity check)."""

    def per_graph(xb, af):
        h = jnp.maximum(adj_norm @ (xb @ params["w1"]) + params["b1"][0], 0.0)
        h = jnp.maximum(adj_norm @ (h @ params["w2"]) + params["b2"][0], 0.0)
        pooled = jnp.mean(h, axis=0)                       # (H,)
        cat = jnp.concatenate([pooled, af], axis=0)        # (H+1,)
        mu = cat @ params["wmu"] + params["bmu"][0]
        sigma = jnp.exp(params["log_sigma"][0] + jnp.zeros_like(mu))
        return mu, sigma

    mu, sigma = jax.vmap(per_graph)(x, add_feat)
    return mu, sigma


if __name__ == "__main__":
    key = jax.random.PRNGKey(0)

    # Small, module-consistent shapes.
    B = 8          # batch of graphs
    N = 16         # nodes per graph
    Fin = 4        # input_dim
    H = 32         # hidden_dim
    A = 4          # action_shape.shape[0]
    E = 48         # number of edges (shared edge_index across the batch)

    keys = jax.random.split(key, 8)

    # Inputs (deterministic).
    x = jax.random.normal(keys[0], (B, N, Fin), dtype=jnp.float32)
    add_feat = jax.random.normal(keys[1], (B, 1), dtype=jnp.float32)
    src = jax.random.randint(keys[2], (E,), 0, N)
    dst = jax.random.randint(keys[3], (E,), 0, N)
    edge_index = jnp.stack([src, dst], axis=0)
    adj_norm = normalized_adjacency(edge_index, N)

    # Parameters (deterministic init; GCNConv weight (Fin,H), bias (H,);
    # fc_mu Linear(H+1 -> A) stored transposed as (H+1, A); sigma_param zeros).
    params = {
        "w1": 0.1 * jax.random.normal(keys[4], (Fin, H), dtype=jnp.float32),
        "b1": jnp.zeros((1, H), dtype=jnp.float32),
        "w2": 0.1 * jax.random.normal(keys[5], (H, H), dtype=jnp.float32),
        "b2": jnp.zeros((1, H), dtype=jnp.float32),
        "wmu": 0.1 * jax.random.normal(keys[6], (H + 1, A), dtype=jnp.float32),
        "bmu": 0.01 * jax.random.normal(keys[7], (1, A), dtype=jnp.float32),
        "log_sigma": jnp.zeros((1, A), dtype=jnp.float32),  # torch.zeros(A, 1)
    }

    mu_ref, sigma_ref = _reference(adj_norm, x, add_feat, params)

    # f32 path (exact check).
    mu, sigma = gnn_actor_forward(adj_norm, x, add_feat, params)
    jax.block_until_ready((mu, sigma))
    assert mu.shape == (B, A) and sigma.shape == (B, A)
    assert jnp.allclose(mu, mu_ref, atol=1e-4, rtol=1e-4)
    assert jnp.allclose(sigma, sigma_ref, atol=1e-4, rtol=1e-4)

    # bf16-operand path (f32 accumulation) — recommended default on v5e and a
    # good fit for v6e/v7x MXUs; checked loosely (Â in bf16 loses a little
    # precision for high-degree nodes).
    mu_bf, sigma_bf = gnn_actor_forward(adj_norm, x, add_feat, params,
                                        compute_dtype=jnp.bfloat16)
    jax.block_until_ready((mu_bf, sigma_bf))
    assert jnp.allclose(mu_bf, mu_ref, atol=1e-1, rtol=1e-1)
    assert jnp.allclose(sigma_bf, sigma_ref, atol=1e-4, rtol=1e-4)

    print("KERNEL_OK")
</pallas_src>

<mosaic_0001>
module attributes {stable_mosaic.version = 11 : i64} {
  func.func @_gnn_actor_kernel(%arg0: memref<16x16xf32, #tpu.memory_space<vmem>>, %arg1: memref<16x128xf32, #tpu.memory_space<vmem>>, %arg2: memref<640x256xf32, #tpu.memory_space<vmem>>, %arg3: memref<3x256xf32, #tpu.memory_space<vmem>>, %arg4: memref<1x256xf32, #tpu.memory_space<vmem>>) attributes {dimension_semantics = [], scalar_prefetch = 0 : i64, scratch_operands = 0 : i64, tpu.core_type = #tpu.core_type<tc>} {
    %c0 = arith.constant 0 : index
    %c0_0 = arith.constant 0 : index
    %0 = vector.load %arg0[%c0, %c0_0] : memref<16x16xf32, #tpu.memory_space<vmem>>, vector<16x16xf32>
    %c0_1 = arith.constant 0 : index
    %c0_2 = arith.constant 0 : index
    %1 = vector.load %arg1[%c0_1, %c0_2] : memref<16x128xf32, #tpu.memory_space<vmem>>, vector<16x128xf32>
    %cst = arith.constant dense<0.000000e+00> : vector<16x128xf32>
    %2 = tpu.matmul %0, %1, %cst {dimension_numbers = #tpu.dot_dimension_numbers<[1], [0], [0], [1], [0, 0, 1, 1], [], []>} : vector<16x16xf32>, vector<16x128xf32>, vector<16x128xf32> -> vector<16x128xf32>
    %c0_3 = arith.constant 0 : index
    %c0_4 = arith.constant 0 : index
    %3 = vector.load %arg2[%c0_3, %c0_4] : memref<640x256xf32, #tpu.memory_space<vmem>>, vector<128x256xf32>
    %cst_5 = arith.constant dense<0.000000e+00> : vector<16x256xf32>
    %4 = tpu.matmul %2, %3, %cst_5 {dimension_numbers = #tpu.dot_dimension_numbers<[1], [0], [0], [1], [0, 0, 1, 1], [], []>} : vector<16x128xf32>, vector<128x256xf32>, vector<16x256xf32> -> vector<16x256xf32>
    %c0_6 = arith.constant 0 : index
    %c0_7 = arith.constant 0 : index
    %5 = vector.load %arg3[%c0_6, %c0_7] : memref<3x256xf32, #tpu.memory_space<vmem>>, vector<1x256xf32>
    %6 = vector.broadcast %5 : vector<1x256xf32> to vector<16x256xf32>
    %7 = arith.addf %4, %6 : vector<16x256xf32>
    %cst_8 = arith.constant 0.000000e+00 : f32
    %8 = vector.broadcast %cst_8 : f32 to vector<16x256xf32>
    %9 = arith.maximumf %7, %8 : vector<16x256xf32>
    %c128 = arith.constant 128 : index
    %c0_9 = arith.constant 0 : index
    %10 = vector.load %arg2[%c128, %c0_9] : memref<640x256xf32, #tpu.memory_space<vmem>>, vector<256x256xf32>
    %cst_10 = arith.constant dense<0.000000e+00> : vector<16x256xf32>
    %11 = tpu.matmul %9, %10, %cst_10 {dimension_numbers = #tpu.dot_dimension_numbers<[1], [0], [0], [1], [0, 0, 1, 1], [], []>} : vector<16x256xf32>, vector<256x256xf32>, vector<16x256xf32> -> vector<16x256xf32>
    %cst_11 = arith.constant dense<0.000000e+00> : vector<16x256xf32>
    %12 = tpu.matmul %0, %11, %cst_11 {dimension_numbers = #tpu.dot_dimension_numbers<[1], [0], [0], [1], [0, 0, 1, 1], [], []>} : vector<16x16xf32>, vector<16x256xf32>, vector<16x256xf32> -> vector<16x256xf32>
    %c1 = arith.constant 1 : index
    %c0_12 = arith.constant 0 : index
    %13 = vector.load %arg3[%c1, %c0_12] : memref<3x256xf32, #tpu.memory_space<vmem>>, vector<1x256xf32>
    %14 = vector.broadcast %13 : vector<1x256xf32> to vector<16x256xf32>
    %15 = arith.addf %12, %14 : vector<16x256xf32>
    %cst_13 = arith.constant 0.000000e+00 : f32
    %16 = vector.broadcast %cst_13 : f32 to vector<16x256xf32>
    %17 = arith.maximumf %15, %16 : vector<16x256xf32>
    %cst_14 = arith.constant dense<0.000000e+00> : vector<256xf32>
    %18 = vector.multi_reduction <add>, %17, %cst_14 [0] : vector<16x256xf32> to vector<256xf32>
    %19 = vector.shape_cast %18 : vector<256xf32> to vector<1x256xf32>
    %c384 = arith.constant 384 : index
    %c0_15 = arith.constant 0 : index
    %20 = vector.load %arg2[%c384, %c0_15] : memref<640x256xf32, #tpu.memory_space<vmem>>, vector<256x256xf32>
    %cst_16 = arith.constant dense<0.000000e+00> : vector<1x256xf32>
    %21 = tpu.matmul %19, %20, %cst_16 {dimension_numbers = #tpu.dot_dimension_numbers<[1], [0], [0], [1], [0, 0, 1, 1], [], []>} : vector<1x256xf32>, vector<256x256xf32>, vector<1x256xf32> -> vector<1x256xf32>
    %c2 = arith.constant 2 : index
    %c0_17 = arith.constant 0 : index
    %22 = vector.load %arg3[%c2, %c0_17] : memref<3x256xf32, #tpu.memory_space<vmem>>, vector<1x256xf32>
    %23 = arith.addf %21, %22 : vector<1x256xf32>
    %c0_18 = arith.constant 0 : index
    %c0_19 = arith.constant 0 : index
    %24 = vector.load %arg4[%c0_18, %c0_19] : memref<1x256xf32, #tpu.memory_space<vmem>>, vector<1x256xf32>
    tpu.vector_store %arg4[%c0_18, %c0_19], %23 {strides = array<i32>} : memref<1x256xf32, #tpu.memory_space<vmem>>, vector<1x256xf32>,
    return
  }
}

</mosaic_0001>

<llo_original>
// kernel: squeeze.1
$region0: #{squeeze.1}
  %s0 = inlined_call_operand.vmem [shape: f32[32], index: 0, kind: input, shape index: {}]
  %s1 = inlined_call_operand.vmem [shape: f32[8,4], index: 1, kind: output, shape index: {}]
  $region1: #{squeeze.1} parent=0
    #allocation0 [shape = 'u8[4096]{0}', space=vmem, size = 0x1000, scoped, tag = 'scoped mem for input reshape']
    %s3 = ssub.s32 2, 1
    %v4 = vld [vmem:[%s0] sm:%s3]
    %5 = vst [vmem:[#allocation0] sm:%s3] %v4
    %v6 = vld [vmem:[#allocation0] sm:$0x1]
    %vm7 = vcmask 31744
    %8 = vst.msk [vmem:[%s1] sm:$0x1] %vm7, %v6
    %v9 = vld [vmem:[#allocation0] sm:$0x1]
    %10 = vrot.lane.b32.xlu0 %v9, 124
    %v11 = vpop.permute.xlu0 %10
    %vm12 = vcmask 31744
    %s13 = scalar_lea.vmem %s1, 1
    %14 = vst.msk [vmem:[%s13] sm:$0x1] %vm12, %v11
    %v15 = vld [vmem:[#allocation0] sm:$0x1]
    %16 = vrot.lane.b32.xlu0 %v15, 120
    %v17 = vpop.permute.xlu0 %16
    %vm18 = vcmask 31744
    %s19 = scalar_lea.vmem %s1, 2
    %20 = vst.msk [vmem:[%s19] sm:$0x1] %vm18, %v17
    %v21 = vld [vmem:[#allocation0] sm:$0x1]
    %22 = vrot.lane.b32.xlu0 %v21, 116
    %v23 = vpop.permute.xlu0 %22
    %vm24 = vcmask 31744
    %s25 = scalar_lea.vmem %s1, 3
    %26 = vst.msk [vmem:[%s25] sm:$0x1] %vm24, %v23
    %v27 = vld [vmem:[#allocation0] sm:$0x1]
    %28 = vrot.lane.b32.xlu0 %v27, 112
    %v29 = vpop.permute.xlu0 %28
    %vm30 = vcmask 31744
    %s31 = scalar_lea.vmem %s1, 4
    %32 = vst.msk [vmem:[%s31] sm:$0x1] %vm30, %v29
    %v33 = vld [vmem:[#allocation0] sm:$0x1]
    %34 = vrot.lane.b32.xlu0 %v33, 108
    %v35 = vpop.permute.xlu0 %34
    %vm36 = vcmask 31744
    %s37 = scalar_lea.vmem %s1, 5
    %38 = vst.msk [vmem:[%s37] sm:$0x1] %vm36, %v35
    %v39 = vld [vmem:[#allocation0] sm:$0x1]
    %40 = vrot.lane.b32.xlu0 %v39, 104
    %v41 = vpop.permute.xlu0 %40
    %vm42 = vcmask 31744
    %s43 = scalar_lea.vmem %s1, 6
    %44 = vst.msk [vmem:[%s43] sm:$0x1] %vm42, %v41
    %v45 = vld [vmem:[#allocation0] sm:$0x1]
    %46 = vrot.lane.b32.xlu0 %v45, 100
    %v47 = vpop.permute.xlu0 %46
    %vm48 = vcmask 31744
    %s49 = scalar_lea.vmem %s1, 7
    %50 = vst.msk [vmem:[%s49] sm:$0x1] %vm48, %v47

// kernel: gnn_actor_forward.1
$region0: #{gnn_actor_forward.1}
  #allocation0 [shape = 'u32[]', space=smem, size = 0x4, offset = 0x4, fixed_abs, tag = 'smem constant byte address 0x4 - core index']
  #allocation1 [shape = 'u32[72,128]{1,0:T(1,128)}', space=vmem, size = 0x9000, scoped, tag = 'internal scratch']
  %s0 = inlined_call_operand.vmem [shape: f32[16,16], index: 0, kind: input, shape index: {}]
  %s1 = inlined_call_operand.vmem [shape: f32[16,128], index: 1, kind: input, shape index: {}]
  %s2 = inlined_call_operand.vmem [shape: f32[640,256], index: 2, kind: input, shape index: {}]
  %s3 = inlined_call_operand.vmem [shape: f32[3,256], index: 3, kind: input, shape index: {}]
  %s4 = inlined_call_operand.vmem [shape: f32[1,256], index: 4, kind: output, shape index: {}]
  %s5 = sld [smem:[#allocation0]]
  $region26: #{gnn_actor_forward.1} parent=0
    _
  %s7 = ssub.s32 1, %s5
  %s8 = scalar_select 0, %s7, %s5
  // Predicated region
  $region2: #{gnn_actor_forward.1} parent=0 // pred_check
    _
  $region3: #{gnn_actor_forward.1} parent=0 // pred_check_branch
    %10 = sbr.rel (0) target = $region5
  $region4: #{gnn_actor_forward.1} parent=0 // pred_region
    _
  $region5: #{gnn_actor_forward.1} parent=0 // pred_fallthru
    _
  // Predicated region
  $region6: #{gnn_actor_forward.1} parent=0 // pred_check
    _
  $region7: #{gnn_actor_forward.1} parent=0 // pred_check_branch
    %12 = sbr.rel (0) target = $region9
  $region8: #{gnn_actor_forward.1} parent=0 // pred_region
    _
  $region9: #{gnn_actor_forward.1} parent=0 // pred_fallthru
    _
  // Predicated region
  $region10: #{gnn_actor_forward.1} parent=0 // pred_check
    _
  $region11: #{gnn_actor_forward.1} parent=0 // pred_check_branch
    %14 = sbr.rel (0) target = $region13
  $region12: #{gnn_actor_forward.1} parent=0 // pred_region
    _
  $region13: #{gnn_actor_forward.1} parent=0 // pred_fallthru
    _
  // Predicated region
  $region14: #{gnn_actor_forward.1} parent=0 // pred_check
    _
  $region15: #{gnn_actor_forward.1} parent=0 // pred_check_branch
    %16 = sbr.rel (0) target = $region17
  $region16: #{gnn_actor_forward.1} parent=0 // pred_region
    _
  $region17: #{gnn_actor_forward.1} parent=0 // pred_fallthru
    _
  %v17 = vld [vmem:[%s0] sm:$0xff]
  %v18 = vld [vmem:[%s0 + $0x8] sm:$0xff]
  %v19 = vld [vmem:[%s1] sm:$0xff]
  %v20 = vld [vmem:[%s1 + $0x8] sm:$0xff]
  %vm21 = vcmask 130048
  %v23 = vsel %vm21, %v17, 0
  %v26 = vsel %vm21, %v18, 0
  %28 = vmatpush.msra.mxu0 0.0
  %29 = vmatpush.msra.mxu0 0.0
  %30 = vmatpush.msra.mxu0 0.0
  %31 = vmatpush.msra.mxu0 0.0
  %32 = vmatpush.msra.mxu0 0.0
  %33 = vmatpush.msra.mxu0 0.0
  %34 = vmatpush.msra.mxu0 0.0
  %35 = vmatpush.msra.mxu0 0.0
  %36 = vmatpush.msra.mxu0 0.0
  %37 = vmatpush.msra.mxu0 0.0
  %38 = vmatpush.msra.mxu0 0.0
  %39 = vmatpush.msra.mxu0 0.0
  %40 = vmatpush.msra.mxu0 0.0
  %41 = vmatpush.msra.mxu0 0.0
  %42 = vmatpush.msra.mxu0 %v20
  %43 = vmatpush.msra.mxu0 %v19
  %44 = vmatmul.f32.gmra.mxu0 %v23
  %v45 = vpop.f32.mrf.mxu0
  %v46 = vadd.f32 0.0, %v45
  %47 = vmatmul.f32.gmra.mxu0 %v26
  %v48 = vpop.f32.mrf.mxu0
  %v49 = vadd.f32 0.0, %v48
  %50 = vdwg.mxu0
  %v51 = vld [vmem:[%s2] sm:$0xff]
  %v52 = vld [vmem:[%s2 + $0x8] sm:$0xff]
  %v53 = vld [vmem:[%s2 + $0x10] sm:$0xff]
  %v54 = vld [vmem:[%s2 + $0x18] sm:$0xff]
  %v55 = vld [vmem:[%s2 + $0x20] sm:$0xff]
  %v56 = vld [vmem:[%s2 + $0x28] sm:$0xff]
  %v57 = vld [vmem:[%s2 + $0x30] sm:$0xff]
  %v58 = vld [vmem:[%s2 + $0x38] sm:$0xff]
  %v59 = vld [vmem:[%s2 + $0x40] sm:$0xff]
  %v60 = vld [vmem:[%s2 + $0x48] sm:$0xff]
  %v61 = vld [vmem:[%s2 + $0x50] sm:$0xff]
  %v62 = vld [vmem:[%s2 + $0x58] sm:$0xff]
  %v63 = vld [vmem:[%s2 + $0x60] sm:$0xff]
  %v64 = vld [vmem:[%s2 + $0x68] sm:$0xff]
  %v65 = vld [vmem:[%s2 + $0x70] sm:$0xff]
  %v66 = vld [vmem:[%s2 + $0x78] sm:$0xff]
  %v67 = vld [vmem:[%s2 + $0x80] sm:$0xff]
  %v68 = vld [vmem:[%s2 + $0x88] sm:$0xff]
  %v69 = vld [vmem:[%s2 + $0x90] sm:$0xff]
  %v70 = vld [vmem:[%s2 + $0x98] sm:$0xff]
  %v71 = vld [vmem:[%s2 + $0xa0] sm:$0xff]
  %v72 = vld [vmem:[%s2 + $0xa8] sm:$0xff]
  %v73 = vld [vmem:[%s2 + $0xb0] sm:$0xff]
  %v74 = vld [vmem:[%s2 + $0xb8] sm:$0xff]
  %v75 = vld [vmem:[%s2 + $0xc0] sm:$0xff]
  %v76 = vld [vmem:[%s2 + $0xc8] sm:$0xff]
  %v77 = vld [vmem:[%s2 + $0xd0] sm:$0xff]
  %v78 = vld [vmem:[%s2 + $0xd8] sm:$0xff]
  %v79 = vld [vmem:[%s2 + $0xe0] sm:$0xff]
  %v80 = vld [vmem:[%s2 + $0xe8] sm:$0xff]
  %v81 = vld [vmem:[%s2 + $0xf0] sm:$0xff]
  %v82 = vld [vmem:[%s2 + $0xf8] sm:$0xff]
  %v83 = vld [vmem:[%s3] ss:$4 sm:$0x3]
  %v85 = vperm.slane %v83, 0
  %v86 = vperm.slane %v83, 1
  %89 = vmatpush.msra.mxu0 %v81
  %90 = vmatpush.msra.mxu0 %v79
  %91 = vmatpush.msra.mxu0 %v77
  %92 = vmatpush.msra.mxu0 %v75
  %93 = vmatpush.msra.mxu0 %v73
  %94 = vmatpush.msra.mxu0 %v71
  %95 = vmatpush.msra.mxu0 %v69
  %96 = vmatpush.msra.mxu0 %v67
  %97 = vmatpush.msra.mxu0 %v65
  %98 = vmatpush.msra.mxu0 %v63
  %99 = vmatpush.msra.mxu0 %v61
  %100 = vmatpush.msra.mxu0 %v59
  %101 = vmatpush.msra.mxu0 %v57
  %102 = vmatpush.msra.mxu0 %v55
  %103 = vmatpush.msra.mxu0 %v53
  %104 = vmatpush.msra.mxu0 %v51
  %105 = vmatmul.f32.gmra.mxu0 %v46
  %v106 = vpop.f32.mrf.mxu0
  %v107 = vadd.f32 %v85, %v106
  %108 = vmatmul.f32.gmra.mxu0 %v49
  %v109 = vpop.f32.mrf.mxu0
  %v110 = vadd.f32 %v85, %v109
  %111 = vdwg.mxu0
  %112 = vmatpush.msra.mxu0 %v82
  %113 = vmatpush.msra.mxu0 %v80
  %114 = vmatpush.msra.mxu0 %v78
  %115 = vmatpush.msra.mxu0 %v76
  %116 = vmatpush.msra.mxu0 %v74
  %117 = vmatpush.msra.mxu0 %v72
  %118 = vmatpush.msra.mxu0 %v70
  %119 = vmatpush.msra.mxu0 %v68
  %120 = vmatpush.msra.mxu0 %v66
  %121 = vmatpush.msra.mxu0 %v64
  %122 = vmatpush.msra.mxu0 %v62
  %123 = vmatpush.msra.mxu0 %v60
  %124 = vmatpush.msra.mxu0 %v58
  %125 = vmatpush.msra.mxu0 %v56
  %126 = vmatpush.msra.mxu0 %v54
  %127 = vmatpush.msra.mxu0 %v52
  %128 = vmatmul.f32.gmra.mxu0 %v46
  %v129 = vpop.f32.mrf.mxu0
  %v130 = vadd.f32 %v86, %v129
  %131 = vmatmul.f32.gmra.mxu0 %v49
  %v132 = vpop.f32.mrf.mxu0
  %v133 = vadd.f32 %v86, %v132
  %134 = vdwg.mxu0
  %v135 = vmax.f32 %v107, 0.0
  %v136 = vmax.f32 %v130, 0.0
  %v137 = vmax.f32 %v110, 0.0
  %v138 = vmax.f32 %v133, 0.0
  %v139 = vld [vmem:[%s2 + $0x100] sm:$0xff]
  %v140 = vld [vmem:[%s2 + $0x108] sm:$0xff]
  %v141 = vld [vmem:[%s2 + $0x110] sm:$0xff]
  %v142 = vld [vmem:[%s2 + $0x118] sm:$0xff]
  %v143 = vld [vmem:[%s2 + $0x120] sm:$0xff]
  %v144 = vld [vmem:[%s2 + $0x128] sm:$0xff]
  %v145 = vld [vmem:[%s2 + $0x130] sm:$0xff]
  %v146 = vld [vmem:[%s2 + $0x138] sm:$0xff]
  %v147 = vld [vmem:[%s2 + $0x140] sm:$0xff]
  %v148 = vld [vmem:[%s2 + $0x148] sm:$0xff]
  %v149 = vld [vmem:[%s2 + $0x150] sm:$0xff]
  %v150 = vld [vmem:[%s2 + $0x158] sm:$0xff]
  %v151 = vld [vmem:[%s2 + $0x160] sm:$0xff]
  %v152 = vld [vmem:[%s2 + $0x168] sm:$0xff]
  %v153 = vld [vmem:[%s2 + $0x170] sm:$0xff]
  %v154 = vld [vmem:[%s2 + $0x178] sm:$0xff]
  %v155 = vld [vmem:[%s2 + $0x180] sm:$0xff]
  %v156 = vld [vmem:[%s2 + $0x188] sm:$0xff]
  %v157 = vld [vmem:[%s2 + $0x190] sm:$0xff]
  %v158 = vld [vmem:[%s2 + $0x198] sm:$0xff]
  %v159 = vld [vmem:[%s2 + $0x1a0] sm:$0xff]
  %v160 = vld [vmem:[%s2 + $0x1a8] sm:$0xff]
  %v161 = vld [vmem:[%s2 + $0x1b0] sm:$0xff]
  %v162 = vld [vmem:[%s2 + $0x1b8] sm:$0xff]
  %v163 = vld [vmem:[%s2 + $0x1c0] sm:$0xff]
  %v164 = vld [vmem:[%s2 + $0x1c8] sm:$0xff]
  %v165 = vld [vmem:[%s2 + $0x1d0] sm:$0xff]
  %v166 = vld [vmem:[%s2 + $0x1d8] sm:$0xff]
  %v167 = vld [vmem:[%s2 + $0x1e0] sm:$0xff]
  %v168 = vld [vmem:[%s2 + $0x1e8] sm:$0xff]
  %v169 = vld [vmem:[%s2 + $0x1f0] sm:$0xff]
  %v170 = vld [vmem:[%s2 + $0x1f8] sm:$0xff]
  %v171 = vld [vmem:[%s2 + $0x200] sm:$0xff]
  %v172 = vld [vmem:[%s2 + $0x208] sm:$0xff]
  %v173 = vld [vmem:[%s2 + $0x210] sm:$0xff]
  %v174 = vld [vmem:[%s2 + $0x218] sm:$0xff]
  %v175 = vld [vmem:[%s2 + $0x220] sm:$0xff]
  %v176 = vld [vmem:[%s2 + $0x228] sm:$0xff]
  %v177 = vld [vmem:[%s2 + $0x230] sm:$0xff]
  %v178 = vld [vmem:[%s2 + $0x238] sm:$0xff]
  %v179 = vld [vmem:[%s2 + $0x240] sm:$0xff]
  %v180 = vld [vmem:[%s2 + $0x248] sm:$0xff]
  %v181 = vld [vmem:[%s2 + $0x250] sm:$0xff]
  %v182 = vld [vmem:[%s2 + $0x258] sm:$0xff]
  %v183 = vld [vmem:[%s2 + $0x260] sm:$0xff]
  %v184 = vld [vmem:[%s2 + $0x268] sm:$0xff]
  %v185 = vld [vmem:[%s2 + $0x270] sm:$0xff]
  %v186 = vld [vmem:[%s2 + $0x278] sm:$0xff]
  %v187 = vld [vmem:[%s2 + $0x280] sm:$0xff]
  %v188 = vld [vmem:[%s2 + $0x288] sm:$0xff]
  %v189 = vld [vmem:[%s2 + $0x290] sm:$0xff]
  %v190 = vld [vmem:[%s2 + $0x298] sm:$0xff]
  %v191 = vld [vmem:[%s2 + $0x2a0] sm:$0xff]
  %v192 = vld [vmem:[%s2 + $0x2a8] sm:$0xff]
  %v193 = vld [vmem:[%s2 + $0x2b0] sm:$0xff]
  %v194 = vld [vmem:[%s2 + $0x2b8] sm:$0xff]
  %v195 = vld [vmem:[%s2 + $0x2c0] sm:$0xff]
  %v196 = vld [vmem:[%s2 + $0x2c8] sm:$0xff]
  %v197 = vld [vmem:[%s2 + $0x2d0] sm:$0xff]
  %v198 = vld [vmem:[%s2 + $0x2d8] sm:$0xff]
  %v199 = vld [vmem:[%s2 + $0x2e0] sm:$0xff]
  %v200 = vld [vmem:[%s2 + $0x2e8] sm:$0xff]
  %v201 = vld [vmem:[%s2 + $0x2f0] sm:$0xff]
  %v202 = vld [vmem:[%s2 + $0x2f8] sm:$0xff]
  %203 = vmatpush.msra.mxu0 %v169
  %204 = vmatpush.msra.mxu0 %v167
  %205 = vmatpush.msra.mxu0 %v165
  %206 = vmatpush.msra.mxu0 %v163
  %207 = vmatpush.msra.mxu0 %v161
  %208 = vmatpush.msra.mxu0 %v159
  %209 = vmatpush.msra.mxu0 %v157
  %210 = vmatpush.msra.mxu0 %v155
  %211 = vmatpush.msra.mxu0 %v153
  %212 = vmatpush.msra.mxu0 %v151
  %213 = vmatpush.msra.mxu0 %v149
  %214 = vmatpush.msra.mxu0 %v147
  %215 = vmatpush.msra.mxu0 %v145
  %216 = vmatpush.msra.mxu0 %v143
  %217 = vmatpush.msra.mxu0 %v141
  %218 = vmatpush.msra.mxu0 %v139
  %219 = vmatmul.f32.gmra.mxu0 %v135
  %v220 = vpop.f32.mrf.mxu0
  %v221 = vadd.f32 0.0, %v220
  %222 = vmatmul.f32.gmra.mxu0 %v137
  %v223 = vpop.f32.mrf.mxu0
  %v224 = vadd.f32 0.0, %v223
  %225 = vdwg.mxu0
  %226 = vmatpush.msra.mxu0 %v201
  %227 = vmatpush.msra.mxu0 %v199
  %228 = vmatpush.msra.mxu0 %v197
  %229 = vmatpush.msra.mxu0 %v195
  %230 = vmatpush.msra.mxu0 %v193
  %231 = vmatpush.msra.mxu0 %v191
  %232 = vmatpush.msra.mxu0 %v189
  %233 = vmatpush.msra.mxu0 %v187
  %234 = vmatpush.msra.mxu0 %v185
  %235 = vmatpush.msra.mxu0 %v183
  %236 = vmatpush.msra.mxu0 %v181
  %237 = vmatpush.msra.mxu0 %v179
  %238 = vmatpush.msra.mxu0 %v177
  %239 = vmatpush.msra.mxu0 %v175
  %240 = vmatpush.msra.mxu0 %v173
  %241 = vmatpush.msra.mxu0 %v171
  %242 = vmatmul.f32.gmra.mxu0 %v136
  %v243 = vpop.f32.mrf.mxu0
  %v244 = vadd.f32 %v221, %v243
  %245 = vmatmul.f32.gmra.mxu0 %v138
  %v246 = vpop.f32.mrf.mxu0
  %v247 = vadd.f32 %v224, %v246
  %248 = vdwg.mxu0
  %249 = vmatpush.msra.mxu0 %v170
  %250 = vmatpush.msra.mxu0 %v168
  %251 = vmatpush.msra.mxu0 %v166
  %252 = vmatpush.msra.mxu0 %v164
  %253 = vmatpush.msra.mxu0 %v162
  %254 = vmatpush.msra.mxu0 %v160
  %255 = vmatpush.msra.mxu0 %v158
  %256 = vmatpush.msra.mxu0 %v156
  %257 = vmatpush.msra.mxu0 %v154
  %258 = vmatpush.msra.mxu0 %v152
  %259 = vmatpush.msra.mxu0 %v150
  %260 = vmatpush.msra.mxu0 %v148
  %261 = vmatpush.msra.mxu0 %v146
  %262 = vmatpush.msra.mxu0 %v144
  %263 = vmatpush.msra.mxu0 %v142
  %264 = vmatpush.msra.mxu0 %v140
  %265 = vmatmul.f32.gmra.mxu0 %v135
  %v266 = vpop.f32.mrf.mxu0
  %v267 = vadd.f32 0.0, %v266
  %268 = vmatmul.f32.gmra.mxu0 %v137
  %v269 = vpop.f32.mrf.mxu0
  %v270 = vadd.f32 0.0, %v269
  %271 = vdwg.mxu0
  %272 = vmatpush.msra.mxu0 %v202
  %273 = vmatpush.msra.mxu0 %v200
  %274 = vmatpush.msra.mxu0 %v198
  %275 = vmatpush.msra.mxu0 %v196
  %276 = vmatpush.msra.mxu0 %v194
  %277 = vmatpush.msra.mxu0 %v192
  %278 = vmatpush.msra.mxu0 %v190
  %279 = vmatpush.msra.mxu0 %v188
  %280 = vmatpush.msra.mxu0 %v186
  %281 = vmatpush.msra.mxu0 %v184
  %282 = vmatpush.msra.mxu0 %v182
  %283 = vmatpush.msra.mxu0 %v180
  %284 = vmatpush.msra.mxu0 %v178
  %285 = vmatpush.msra.mxu0 %v176
  %286 = vmatpush.msra.mxu0 %v174
  %287 = vmatpush.msra.mxu0 %v172
  %288 = vmatmul.f32.gmra.mxu0 %v136
  %v289 = vpop.f32.mrf.mxu0
  %v290 = vadd.f32 %v267, %v289
  %291 = vmatmul.f32.gmra.mxu0 %v138
  %v292 = vpop.f32.mrf.mxu0
  %v293 = vadd.f32 %v270, %v292
  %294 = vdwg.mxu0
  %s295 = scalar_lea.vmem %s3, 1
  %v296 = vld [vmem:[%s295] ss:$4 sm:$0x3]
  %v298 = vperm.slane %v296, 0
  %v299 = vperm.slane %v296, 1
  %302 = vmatpush.msra.mxu0 0.0
  %303 = vmatpush.msra.mxu0 0.0
  %304 = vmatpush.msra.mxu0 0.0
  %305 = vmatpush.msra.mxu0 0.0
  %306 = vmatpush.msra.mxu0 0.0
  %307 = vmatpush.msra.mxu0 0.0
  %308 = vmatpush.msra.mxu0 0.0
  %309 = vmatpush.msra.mxu0 0.0
  %310 = vmatpush.msra.mxu0 0.0
  %311 = vmatpush.msra.mxu0 0.0
  %312 = vmatpush.msra.mxu0 0.0
  %313 = vmatpush.msra.mxu0 0.0
  %314 = vmatpush.msra.mxu0 0.0
  %315 = vmatpush.msra.mxu0 0.0
  %316 = vmatpush.msra.mxu0 %v247
  %317 = vmatpush.msra.mxu0 %v244
  %318 = vmatmul.f32.gmra.mxu0 %v23
  %v319 = vpop.f32.mrf.mxu0
  %v320 = vadd.f32 %v298, %v319
  %321 = vmatmul.f32.gmra.mxu0 %v26
  %v322 = vpop.f32.mrf.mxu0
  %v323 = vadd.f32 %v298, %v322
  %324 = vdwg.mxu0
  %325 = vmatpush.msra.mxu0 0.0
  %326 = vmatpush.msra.mxu0 0.0
  %327 = vmatpush.msra.mxu0 0.0
  %328 = vmatpush.msra.mxu0 0.0
  %329 = vmatpush.msra.mxu0 0.0
  %330 = vmatpush.msra.mxu0 0.0
  %331 = vmatpush.msra.mxu0 0.0
  %332 = vmatpush.msra.mxu0 0.0
  %333 = vmatpush.msra.mxu0 0.0
  %334 = vmatpush.msra.mxu0 0.0
  %335 = vmatpush.msra.mxu0 0.0
  %336 = vmatpush.msra.mxu0 0.0
  %337 = vmatpush.msra.mxu0 0.0
  %338 = vmatpush.msra.mxu0 0.0
  %339 = vmatpush.msra.mxu0 %v293
  %340 = vmatpush.msra.mxu0 %v290
  %341 = vmatmul.f32.gmra.mxu0 %v23
  %v342 = vpop.f32.mrf.mxu0
  %v343 = vadd.f32 %v299, %v342
  %344 = vmatmul.f32.gmra.mxu0 %v26
  %v345 = vpop.f32.mrf.mxu0
  %v346 = vadd.f32 %v299, %v345
  %347 = vdwg.mxu0
  %v348 = vmax.f32 %v320, 0.0
  %v349 = vmax.f32 %v343, 0.0
  %v350 = vmax.f32 %v323, 0.0
  %v351 = vmax.f32 %v346, 0.0
  %v352 = vadd.f32 %v348, %v350
  %v353 = vrot.slane %v352, 4
  %v354 = vadd.f32 %v352, %v353
  %v355 = vrot.slane %v354, 2
  %v356 = vadd.f32 %v354, %v355
  %v357 = vrot.slane %v356, 1
  %v358 = vadd.f32 %v356, %v357
  %v359 = vadd.f32 %v349, %v351
  %v360 = vrot.slane %v359, 4
  %v361 = vadd.f32 %v359, %v360
  %v362 = vrot.slane %v361, 2
  %v363 = vadd.f32 %v361, %v362
  %v364 = vrot.slane %v363, 1
  %v365 = vadd.f32 %v363, %v364
  %v366 = vld [vmem:[%s2 + $0x300] sm:$0xff]
  %v367 = vld [vmem:[%s2 + $0x308] sm:$0xff]
  %v368 = vld [vmem:[%s2 + $0x310] sm:$0xff]
  %v369 = vld [vmem:[%s2 + $0x318] sm:$0xff]
  %v370 = vld [vmem:[%s2 + $0x320] sm:$0xff]
  %v371 = vld [vmem:[%s2 + $0x328] sm:$0xff]
  %v372 = vld [vmem:[%s2 + $0x330] sm:$0xff]
  %v373 = vld [vmem:[%s2 + $0x338] sm:$0xff]
  %v374 = vld [vmem:[%s2 + $0x340] sm:$0xff]
  %v375 = vld [vmem:[%s2 + $0x348] sm:$0xff]
  %v376 = vld [vmem:[%s2 + $0x350] sm:$0xff]
  %v377 = vld [vmem:[%s2 + $0x358] sm:$0xff]
  %v378 = vld [vmem:[%s2 + $0x360] sm:$0xff]
  %v379 = vld [vmem:[%s2 + $0x368] sm:$0xff]
  %v380 = vld [vmem:[%s2 + $0x370] sm:$0xff]
  %v381 = vld [vmem:[%s2 + $0x378] sm:$0xff]
  %v382 = vld [vmem:[%s2 + $0x380] sm:$0xff]
  %v383 = vld [vmem:[%s2 + $0x388] sm:$0xff]
  %v384 = vld [vmem:[%s2 + $0x390] sm:$0xff]
  %v385 = vld [vmem:[%s2 + $0x398] sm:$0xff]
  %v386 = vld [vmem:[%s2 + $0x3a0] sm:$0xff]
  %v387 = vld [vmem:[%s2 + $0x3a8] sm:$0xff]
  %v388 = vld [vmem:[%s2 + $0x3b0] sm:$0xff]
  %v389 = vld [vmem:[%s2 + $0x3b8] sm:$0xff]
  %v390 = vld [vmem:[%s2 + $0x3c0] sm:$0xff]
  %v391 = vld [vmem:[%s2 + $0x3c8] sm:$0xff]
  %v392 = vld [vmem:[%s2 + $0x3d0] sm:$0xff]
  %v393 = vld [vmem:[%s2 + $0x3d8] sm:$0xff]
  %v394 = vld [vmem:[%s2 + $0x3e0] sm:$0xff]
  %v395 = vld [vmem:[%s2 + $0x3e8] sm:$0xff]
  %v396 = vld [vmem:[%s2 + $0x3f0] sm:$0xff]
  %v397 = vld [vmem:[%s2 + $0x3f8] sm:$0xff]
  %v398 = vld [vmem:[%s2 + $0x400] sm:$0xff]
  %v399 = vld [vmem:[%s2 + $0x408] sm:$0xff]
  %v400 = vld [vmem:[%s2 + $0x410] sm:$0xff]
  %v401 = vld [vmem:[%s2 + $0x418] sm:$0xff]
  %v402 = vld [vmem:[%s2 + $0x420] sm:$0xff]
  %v403 = vld [vmem:[%s2 + $0x428] sm:$0xff]
  %v404 = vld [vmem:[%s2 + $0x430] sm:$0xff]
  %v405 = vld [vmem:[%s2 + $0x438] sm:$0xff]
  %v406 = vld [vmem:[%s2 + $0x440] sm:$0xff]
  %v407 = vld [vmem:[%s2 + $0x448] sm:$0xff]
  %v408 = vld [vmem:[%s2 + $0x450] sm:$0xff]
  %v409 = vld [vmem:[%s2 + $0x458] sm:$0xff]
  %v410 = vld [vmem:[%s2 + $0x460] sm:$0xff]
  %v411 = vld [vmem:[%s2 + $0x468] sm:$0xff]
  %v412 = vld [vmem:[%s2 + $0x470] sm:$0xff]
  %v413 = vld [vmem:[%s2 + $0x478] sm:$0xff]
  %v414 = vld [vmem:[%s2 + $0x480] sm:$0xff]
  %v415 = vld [vmem:[%s2 + $0x488] sm:$0xff]
  %v416 = vld [vmem:[%s2 + $0x490] sm:$0xff]
  %v417 = vld [vmem:[%s2 + $0x498] sm:$0xff]
  %v418 = vld [vmem:[%s2 + $0x4a0] sm:$0xff]
  %v419 = vld [vmem:[%s2 + $0x4a8] sm:$0xff]
  %v420 = vld [vmem:[%s2 + $0x4b0] sm:$0xff]
  %v421 = vld [vmem:[%s2 + $0x4b8] sm:$0xff]
  %v422 = vld [vmem:[%s2 + $0x4c0] sm:$0xff]
  %v423 = vld [vmem:[%s2 + $0x4c8] sm:$0xff]
  %v424 = vld [vmem:[%s2 + $0x4d0] sm:$0xff]
  %v425 = vld [vmem:[%s2 + $0x4d8] sm:$0xff]
  %v426 = vld [vmem:[%s2 + $0x4e0] sm:$0xff]
  %v427 = vld [vmem:[%s2 + $0x4e8] sm:$0xff]
  %v428 = vld [vmem:[%s2 + $0x4f0] sm:$0xff]
  %v429 = vld [vmem:[%s2 + $0x4f8] sm:$0xff]
  %s430 = scalar_lea.vmem %s3, 2
  %v431 = vld [vmem:[%s430] ss:$4 sm:$0x3]
  %v433 = vperm.slane %v431, 0
  %v434 = vperm.slane %v431, 1
  %437 = vmatpush.msra.mxu0 %v396
  %438 = vmatpush.msra.mxu0 %v394
  %439 = vmatpush.msra.mxu0 %v392
  %440 = vmatpush.msra.mxu0 %v390
  %441 = vmatpush.msra.mxu0 %v388
  %442 = vmatpush.msra.mxu0 %v386
  %443 = vmatpush.msra.mxu0 %v384
  %444 = vmatpush.msra.mxu0 %v382
  %445 = vmatpush.msra.mxu0 %v380
  %446 = vmatpush.msra.mxu0 %v378
  %447 = vmatpush.msra.mxu0 %v376
  %448 = vmatpush.msra.mxu0 %v374
  %449 = vmatpush.msra.mxu0 %v372
  %450 = vmatpush.msra.mxu0 %v370
  %451 = vmatpush.msra.mxu0 %v368
  %452 = vmatpush.msra.mxu0 %v366
  %453 = vmatmul.f32.gmra.mxu0 %v358
  %v454 = vpop.f32.mrf.mxu0
  %v455 = vadd.f32 %v433, %v454
  %456 = vdwg.mxu0
  %457 = vmatpush.msra.mxu0 %v428
  %458 = vmatpush.msra.mxu0 %v426
  %459 = vmatpush.msra.mxu0 %v424
  %460 = vmatpush.msra.mxu0 %v422
  %461 = vmatpush.msra.mxu0 %v420
  %462 = vmatpush.msra.mxu0 %v418
  %463 = vmatpush.msra.mxu0 %v416
  %464 = vmatpush.msra.mxu0 %v414
  %465 = vmatpush.msra.mxu0 %v412
  %466 = vmatpush.msra.mxu0 %v410
  %467 = vmatpush.msra.mxu0 %v408
  %468 = vmatpush.msra.mxu0 %v406
  %469 = vmatpush.msra.mxu0 %v404
  %470 = vmatpush.msra.mxu0 %v402
  %471 = vmatpush.msra.mxu0 %v400
  %472 = vmatpush.msra.mxu0 %v398
  %473 = vmatmul.f32.gmra.mxu0 %v365
  %v474 = vpop.f32.mrf.mxu0
  %v475 = vadd.f32 %v455, %v474
  %476 = vdwg.mxu0
  %477 = vmatpush.msra.mxu0 %v397
  %478 = vmatpush.msra.mxu0 %v395
  %479 = vmatpush.msra.mxu0 %v393
  %480 = vmatpush.msra.mxu0 %v391
  %481 = vmatpush.msra.mxu0 %v389
  %482 = vmatpush.msra.mxu0 %v387
  %483 = vmatpush.msra.mxu0 %v385
  %484 = vmatpush.msra.mxu0 %v383
  %485 = vmatpush.msra.mxu0 %v381
  %486 = vmatpush.msra.mxu0 %v379
  %487 = vmatpush.msra.mxu0 %v377
  %488 = vmatpush.msra.mxu0 %v375
  %489 = vmatpush.msra.mxu0 %v373
  %490 = vmatpush.msra.mxu0 %v371
  %491 = vmatpush.msra.mxu0 %v369
  %492 = vmatpush.msra.mxu0 %v367
  %493 = vmatmul.f32.gmra.mxu0 %v358
  %v494 = vpop.f32.mrf.mxu0
  %v495 = vadd.f32 %v434, %v494
  %496 = vdwg.mxu0
  %497 = vmatpush.msra.mxu0 %v429
  %498 = vmatpush.msra.mxu0 %v427
  %499 = vmatpush.msra.mxu0 %v425
  %500 = vmatpush.msra.mxu0 %v423
  %501 = vmatpush.msra.mxu0 %v421
  %502 = vmatpush.msra.mxu0 %v419
  %503 = vmatpush.msra.mxu0 %v417
  %504 = vmatpush.msra.mxu0 %v415
  %505 = vmatpush.msra.mxu0 %v413
  %506 = vmatpush.msra.mxu0 %v411
  %507 = vmatpush.msra.mxu0 %v409
  %508 = vmatpush.msra.mxu0 %v407
  %509 = vmatpush.msra.mxu0 %v405
  %510 = vmatpush.msra.mxu0 %v403
  %511 = vmatpush.msra.mxu0 %v401
  %512 = vmatpush.msra.mxu0 %v399
  %513 = vmatmul.f32.gmra.mxu0 %v365
  %v514 = vpop.f32.mrf.mxu0
  %v515 = vadd.f32 %v495, %v514
  %516 = vdwg.mxu0
  %v519 = vrot.slane %v515, 7
  %vm520 = vcmask 1040384
  %v521 = vsel %vm520, %v475, %v519
  %v523 = vlaneseq
  %vm524 = vcmp.ge.s32.totalorder %v523, 0
  %vm525 = vcmp.lt.s32.totalorder %v523, 256
  %vm526 = vmand %vm524, %vm525
  %527 = vst.msk [vmem:[%s4] sm:$0x3] %vm526, %v521
  // Predicated region
  $region18: #{gnn_actor_forward.1} parent=0 // pred_check
    _
  $region19: #{gnn_actor_forward.1} parent=0 // pred_check_branch
    %529 = sbr.rel (0) target = $region21
  $region20: #{gnn_actor_forward.1} parent=0 // pred_region
    _
  $region21: #{gnn_actor_forward.1} parent=0 // pred_fallthru
    _
  // Predicated region
  $region22: #{gnn_actor_forward.1} parent=0 // pred_check
    _
  $region23: #{gnn_actor_forward.1} parent=0 // pred_check_branch
    %531 = sbr.rel (0) target = $region25
  $region24: #{gnn_actor_forward.1} parent=0 // pred_region
    _
  $region25: #{gnn_actor_forward.1} parent=0 // pred_fallthru
    _

</llo_original>
